<compile_context>
chip_gen: v6e
topology: v6e:2x2x1
jax: 0.10.0
libtpu: 0.0.40
codegen_flags: <defaults>
</compile_context>

<pallas_src>
import functools

import jax
import jax.numpy as jnp
from jax.experimental import pallas as pl
from jax.experimental.pallas import tpu as pltpu


# ---------------------------------------------------------------------------
# Fused kernel: input projection -> recurrence -> FC head, per chunk.
# ---------------------------------------------------------------------------
def _lstm_fused_kernel(x_ref, w_ih_ref, w_hh_ref, w_fc_ref, bg_ref, bf_ref,
                       y_ref, gx_sc, h_all_sc, h_sc, c_sc, *, unroll):
    t_chunk, b_chunk, _ = x_ref.shape
    H = w_hh_ref.shape[0]

    @pl.when(pl.program_id(1) == 0)          # first time-chunk of this batch block
    def _():
        h_sc[...] = jnp.zeros_like(h_sc)
        c_sc[...] = jnp.zeros_like(c_sc)

    w_ih = w_ih_ref[...]                      # (I, 4H)  bf16
    w_hh = w_hh_ref[...]                      # (H, 4H)  bf16, loop-invariant

    # --- Prologue: hoisted input projection + biases for the whole chunk
    #     (one MXU dot, fused; removes the gates_x HBM round trip).
    x2d = x_ref[...].reshape(t_chunk * b_chunk, x_ref.shape[2])
    gx = jnp.dot(x2d.astype(w_ih.dtype), w_ih,
                 preferred_element_type=jnp.float32) + bg_ref[...]
    gx_sc[...] = gx.reshape(t_chunk, b_chunk, 4 * H)

    # --- Serial recurrence: only h @ W_hh^T is on the critical path.
    def step(s, carry):
        h, c = carry
        gates = gx_sc[s] + jnp.dot(h.astype(w_hh.dtype), w_hh,
                                   preferred_element_type=jnp.float32)
        i_g = jax.nn.sigmoid(gates[:, 0 * H:1 * H])
        f_g = jax.nn.sigmoid(gates[:, 1 * H:2 * H])
        g_g = jnp.tanh(gates[:, 2 * H:3 * H])
        o_g = jax.nn.sigmoid(gates[:, 3 * H:4 * H])
        c_new = f_g * c + i_g * g_g            # f32 state math (v5e has no bf16 VPU)
        h_new = o_g * jnp.tanh(c_new)
        h_all_sc[s] = h_new
        return h_new, c_new

    h_fin, c_fin = jax.lax.fori_loop(0, t_chunk, step,
                                     (h_sc[...], c_sc[...]), unroll=unroll)
    h_sc[...] = h_fin
    c_sc[...] = c_fin

    # --- Epilogue: FC head fused on the chunk's hidden states (one MXU dot).
    h2d = h_all_sc[...].reshape(t_chunk * b_chunk, H)
    y = jnp.dot(h2d.astype(w_fc_ref.dtype), w_fc_ref[...],
                preferred_element_type=jnp.float32) + bf_ref[...]
    y_ref[...] = y.reshape(y_ref.shape).astype(y_ref.dtype)


# ---------------------------------------------------------------------------
# Chunk-size heuristic (overridable).
# ---------------------------------------------------------------------------
def _pick_chunks(T, B, I, H, budget_bytes=16 * 1024 * 1024):
    """t_chunk: largest divisor of T with T//t_chunk >= 2 fitting the VMEM budget.
    b_chunk: multiple-of-8 divisor of B, <= B/2 when possible (megacore)."""
    div = lambda n: [d for d in range(1, n + 1) if n % d == 0]

    b_cands = [d for d in div(B) if d % 8 == 0] or [B]
    small = [d for d in b_cands if d <= max(B // 2, 8)]
    b_chunk = max(small) if small else min(b_cands)

    # Rough per-time-row VMEM: double-buffered x & y blocks + gx & h scratch.
    per_t = b_chunk * 4 * (2 * I + 2 * I + 4 * H + H)
    non_full = [d for d in div(T) if d < T]
    fit = [d for d in non_full if d * per_t <= budget_bytes]
    if fit:
        t_chunk = max(fit)
    elif non_full:
        t_chunk = min(non_full)
    else:
        t_chunk = T
    return t_chunk, b_chunk


# ---------------------------------------------------------------------------
# Full forward (single pallas_call).
# ---------------------------------------------------------------------------
def lstm_time_forward(x, params, *, t_chunk=None, b_chunk=None,
                      vmem_limit_bytes=48 * 1024 * 1024):
    """x: (T, B, I) float32.  params: dict of pre-transposed weights."""
    T, B, I = x.shape
    H = params["w_hh_t"].shape[0]
    G = 4 * H

    auto_t, auto_b = _pick_chunks(T, B, I, H)
    if t_chunk is None:
        t_chunk = auto_t
    if b_chunk is None:
        b_chunk = auto_b
    assert T % t_chunk == 0 and B % b_chunk == 0
    assert b_chunk % 8 == 0 or b_chunk == B, "b_chunk should be a multiple of 8"
    # TODO(synk): at production sizes pad H to a multiple of 128 so the per-step
    # gate slices stay vreg-aligned, and stage the constant weight blocks
    # single-buffered (pl.Buffered(1)) to save VMEM on v7x.

    # Cap loop unrolling to control vreg pressure at large b_chunk*H.
    unroll = t_chunk if t_chunk <= 8 else 4

    kernel = functools.partial(_lstm_fused_kernel, unroll=unroll)

    return pl.pallas_call(
        kernel,
        out_shape=jax.ShapeDtypeStruct((T, B, I), jnp.float32),
        grid_spec=pltpu.PrefetchScalarGridSpec(
            num_scalar_prefetch=0,
            grid=(B // b_chunk, T // t_chunk),
            in_specs=[
                pl.BlockSpec((t_chunk, b_chunk, I), lambda b, t: (t, b, 0)),  # x
                pl.BlockSpec((I, G), lambda b, t: (0, 0)),                    # W_ih^T
                pl.BlockSpec((H, G), lambda b, t: (0, 0)),                    # W_hh^T
                pl.BlockSpec((H, I), lambda b, t: (0, 0)),                    # W_fc^T
                pl.BlockSpec((1, G), lambda b, t: (0, 0)),                    # b_ih+b_hh
                pl.BlockSpec((1, I), lambda b, t: (0, 0)),                    # b_fc
            ],
            out_specs=pl.BlockSpec((t_chunk, b_chunk, I), lambda b, t: (t, b, 0)),
            scratch_shapes=[
                pltpu.VMEM((t_chunk, b_chunk, G), jnp.float32),   # gx (x-projection)
                pltpu.VMEM((t_chunk, b_chunk, H), jnp.float32),   # chunk hidden states
                pltpu.VMEM((b_chunk, H), jnp.float32),            # h carry
                pltpu.VMEM((b_chunk, H), jnp.float32),            # c carry
            ],
        ),
        compiler_params=pltpu.CompilerParams(
            # batch axis parallel (megacore), time axis carries the recurrence.
            dimension_semantics=("parallel", "arbitrary"),
            vmem_limit_bytes=vmem_limit_bytes,
        ),
    )(x, params["w_ih_t"], params["w_hh_t"], params["w_fc_t"],
      params["b_gates"], params["b_fc"])


# ---------------------------------------------------------------------------
# Params & pure-JAX reference (PyTorch-equivalent forward).
# ---------------------------------------------------------------------------
def init_params(key, input_size, hidden_size, weight_dtype=jnp.bfloat16):
    """Deterministic init matching PyTorch param shapes (uniform +-1/sqrt(H)).
    Weights stored pre-transposed and in bf16 (fast MXU path); biases in f32."""
    k = 1.0 / jnp.sqrt(hidden_size)
    keys = jax.random.split(key, 6)
    w_ih = jax.random.uniform(keys[0], (4 * hidden_size, input_size), jnp.float32, -k, k)
    w_hh = jax.random.uniform(keys[1], (4 * hidden_size, hidden_size), jnp.float32, -k, k)
    b_ih = jax.random.uniform(keys[2], (4 * hidden_size,), jnp.float32, -k, k)
    b_hh = jax.random.uniform(keys[3], (4 * hidden_size,), jnp.float32, -k, k)
    w_fc = jax.random.uniform(keys[4], (input_size, hidden_size), jnp.float32, -k, k)
    b_fc = jax.random.uniform(keys[5], (input_size,), jnp.float32, -k, k)
    return {
        "w_ih_t": w_ih.T.astype(weight_dtype),              # (I, 4H)
        "w_hh_t": w_hh.T.astype(weight_dtype),              # (H, 4H)
        "b_gates": (b_ih + b_hh)[None, :],                  # (1, 4H) f32
        "w_fc_t": w_fc.T.astype(weight_dtype),              # (H, I)
        "b_fc": b_fc[None, :],                               # (1, I) f32
    }


def lstm_time_reference(x, params):
    """Pure-JAX reference of the PyTorch forward (same dtype discipline:
    bf16 matmul operands, f32 accumulation and activations)."""
    T, B, I = x.shape
    H = params["w_hh_t"].shape[0]
    wd = params["w_hh_t"].dtype
    h0 = jnp.zeros((B, H), jnp.float32)
    c0 = jnp.zeros((B, H), jnp.float32)

    def step(carry, x_t):
        h, c = carry
        gates = (jnp.dot(x_t.astype(wd), params["w_ih_t"],
                         preferred_element_type=jnp.float32)
                 + jnp.dot(h.astype(wd), params["w_hh_t"],
                           preferred_element_type=jnp.float32)
                 + params["b_gates"])
        i_g = jax.nn.sigmoid(gates[:, 0 * H:1 * H])
        f_g = jax.nn.sigmoid(gates[:, 1 * H:2 * H])
        g_g = jnp.tanh(gates[:, 2 * H:3 * H])
        o_g = jax.nn.sigmoid(gates[:, 3 * H:4 * H])
        c_new = f_g * c + i_g * g_g
        h_new = o_g * jnp.tanh(c_new)
        y_t = jnp.dot(h_new.astype(wd), params["w_fc_t"],
                      preferred_element_type=jnp.float32) + params["b_fc"]
        return (h_new, c_new), y_t

    _, ys = jax.lax.scan(step, (h0, c0), x)
    return ys


if __name__ == "__main__":
    seq_len, batch, input_size, hidden_size = 8, 8, 8, 32

    key = jax.random.PRNGKey(0)
    key_x, key_p = jax.random.split(key)
    x = jax.random.normal(key_x, (seq_len, batch, input_size), jnp.float32)
    params = init_params(key_p, input_size, hidden_size)

    # Heuristic picks t_chunk=4, b_chunk=8 -> grid (1, 2): exercises h/c scratch
    # persistence across time chunks plus the fused prologue/epilogue.
    y = jax.block_until_ready(lstm_time_forward(x, params))

    y_ref = jax.block_until_ready(lstm_time_reference(x, params))
    assert y.shape == (seq_len, batch, input_size)
    assert jnp.allclose(y, y_ref, atol=1e-3, rtol=1e-3), "mismatch vs reference"

    print("KERNEL_OK")
</pallas_src>

<mosaic_0001>
module attributes {stable_mosaic.version = 11 : i64} {
  func.func @_lstm_fused_kernel(%arg0: i32, %arg1: i32, %arg2: memref<4x8x8xf32, #tpu.memory_space<vmem>>, %arg3: memref<8x128xbf16, #tpu.memory_space<vmem>>, %arg4: memref<32x128xbf16, #tpu.memory_space<vmem>>, %arg5: memref<32x8xbf16, #tpu.memory_space<vmem>>, %arg6: memref<1x128xf32, #tpu.memory_space<vmem>>, %arg7: memref<1x8xf32, #tpu.memory_space<vmem>>, %arg8: memref<4x8x8xf32, #tpu.memory_space<vmem>>, %arg9: memref<4x8x128xf32, #tpu.memory_space<vmem>>, %arg10: memref<4x8x32xf32, #tpu.memory_space<vmem>>, %arg11: memref<8x32xf32, #tpu.memory_space<vmem>>, %arg12: memref<8x32xf32, #tpu.memory_space<vmem>>) attributes {dimension_semantics = [#tpu.dimension_semantics<parallel>, #tpu.dimension_semantics<arbitrary>], iteration_bounds = array<i64: 1, 2>, scalar_prefetch = 0 : i64, scratch_operands = 4 : i64, tpu.core_type = #tpu.core_type<tc>, window_params = [{transform_indices = @transform_0, window_bounds = array<i64: 4, 8, 8>}, {pipeline_mode = #tpu.pipeline_mode<synchronous>, transform_indices = @transform_1, window_bounds = array<i64: 8, 128>}, {pipeline_mode = #tpu.pipeline_mode<synchronous>, transform_indices = @transform_2, window_bounds = array<i64: 32, 128>}, {pipeline_mode = #tpu.pipeline_mode<synchronous>, transform_indices = @transform_3, window_bounds = array<i64: 32, 8>}, {pipeline_mode = #tpu.pipeline_mode<synchronous>, transform_indices = @transform_4, window_bounds = array<i64: 1, 128>}, {pipeline_mode = #tpu.pipeline_mode<synchronous>, transform_indices = @transform_5, window_bounds = array<i64: 1, 8>}, {transform_indices = @transform_6, window_bounds = array<i64: 4, 8, 8>}]} {
    %c0_i32 = arith.constant 0 : i32
    %0 = arith.cmpi eq, %arg1, %c0_i32 : i32
    %1 = arith.extui %0 : i1 to i32
    %c0_i32_0 = arith.constant 0 : i32
    %2 = arith.cmpi ne, %1, %c0_i32_0 : i32
    scf.if %2 {
      %cst_64 = arith.constant 0.000000e+00 : f32
      %168 = vector.broadcast %cst_64 : f32 to vector<8x32xf32>
      %c0_65 = arith.constant 0 : index
      %c0_66 = arith.constant 0 : index
      %169 = vector.load %arg11[%c0_65, %c0_66] : memref<8x32xf32, #tpu.memory_space<vmem>>, vector<8x32xf32>
      tpu.vector_store %arg11[%c0_65, %c0_66], %168 {strides = array<i32>} : memref<8x32xf32, #tpu.memory_space<vmem>>, vector<8x32xf32>,
      %cst_67 = arith.constant 0.000000e+00 : f32
      %170 = vector.broadcast %cst_67 : f32 to vector<8x32xf32>
      %c0_68 = arith.constant 0 : index
      %c0_69 = arith.constant 0 : index
      %171 = vector.load %arg12[%c0_68, %c0_69] : memref<8x32xf32, #tpu.memory_space<vmem>>, vector<8x32xf32>
      tpu.vector_store %arg12[%c0_68, %c0_69], %170 {strides = array<i32>} : memref<8x32xf32, #tpu.memory_space<vmem>>, vector<8x32xf32>,
    } else {
    }
    %c0 = arith.constant 0 : index
    %c0_1 = arith.constant 0 : index
    %3 = vector.load %arg3[%c0, %c0_1] : memref<8x128xbf16, #tpu.memory_space<vmem>>, vector<8x128xbf16>
    %c0_2 = arith.constant 0 : index
    %c0_3 = arith.constant 0 : index
    %4 = vector.load %arg4[%c0_2, %c0_3] : memref<32x128xbf16, #tpu.memory_space<vmem>>, vector<32x128xbf16>
    %c0_4 = arith.constant 0 : index
    %c0_5 = arith.constant 0 : index
    %c0_6 = arith.constant 0 : index
    %5 = vector.load %arg2[%c0_4, %c0_5, %c0_6] : memref<4x8x8xf32, #tpu.memory_space<vmem>>, vector<4x8x8xf32>
    %6 = vector.shape_cast %5 : vector<4x8x8xf32> to vector<32x8xf32>
    %7 = arith.truncf %6 : vector<32x8xf32> to vector<32x8xbf16>
    %cst = arith.constant dense<0.000000e+00> : vector<32x128xf32>
    %8 = tpu.matmul %7, %3, %cst {dimension_numbers = #tpu.dot_dimension_numbers<[1], [0], [0], [1], [0, 0, 1, 1], [], []>} : vector<32x8xbf16>, vector<8x128xbf16>, vector<32x128xf32> -> vector<32x128xf32>
    %c0_7 = arith.constant 0 : index
    %c0_8 = arith.constant 0 : index
    %9 = vector.load %arg6[%c0_7, %c0_8] : memref<1x128xf32, #tpu.memory_space<vmem>>, vector<1x128xf32>
    %10 = vector.broadcast %9 : vector<1x128xf32> to vector<32x128xf32>
    %11 = arith.addf %8, %10 : vector<32x128xf32>
    %12 = vector.shape_cast %11 : vector<32x128xf32> to vector<4x8x128xf32>
    %c0_9 = arith.constant 0 : index
    %c0_10 = arith.constant 0 : index
    %c0_11 = arith.constant 0 : index
    %13 = vector.load %arg9[%c0_9, %c0_10, %c0_11] : memref<4x8x128xf32, #tpu.memory_space<vmem>>, vector<4x8x128xf32>
    tpu.vector_store %arg9[%c0_9, %c0_10, %c0_11], %12 {strides = array<i32>} : memref<4x8x128xf32, #tpu.memory_space<vmem>>, vector<4x8x128xf32>,
    %c0_12 = arith.constant 0 : index
    %c0_13 = arith.constant 0 : index
    %14 = vector.load %arg11[%c0_12, %c0_13] : memref<8x32xf32, #tpu.memory_space<vmem>>, vector<8x32xf32>
    %c0_14 = arith.constant 0 : index
    %c0_15 = arith.constant 0 : index
    %15 = vector.load %arg12[%c0_14, %c0_15] : memref<8x32xf32, #tpu.memory_space<vmem>>, vector<8x32xf32>
    %c0_i32_16 = arith.constant 0 : i32
    %16 = arith.index_cast %c0_i32_16 : i32 to index
    %c0_17 = arith.constant 0 : index
    %c0_18 = arith.constant 0 : index
    %17 = vector.load %arg9[%16, %c0_17, %c0_18] : memref<4x8x128xf32, #tpu.memory_space<vmem>>, vector<1x8x128xf32>
    %18 = vector.shape_cast %17 : vector<1x8x128xf32> to vector<8x128xf32>
    %19 = arith.truncf %14 : vector<8x32xf32> to vector<8x32xbf16>
    %cst_19 = arith.constant dense<0.000000e+00> : vector<8x128xf32>
    %20 = tpu.matmul %19, %4, %cst_19 {dimension_numbers = #tpu.dot_dimension_numbers<[1], [0], [0], [1], [0, 0, 1, 1], [], []>} : vector<8x32xbf16>, vector<32x128xbf16>, vector<8x128xf32> -> vector<8x128xf32>
    %21 = arith.addf %18, %20 : vector<8x128xf32>
    %22 = vector.extract_strided_slice %21 {offsets = [0, 0], sizes = [8, 32], strides = [1, 1]} : vector<8x128xf32> to vector<8x32xf32>
    %23 = arith.negf %22 : vector<8x32xf32>
    %24 = math.exp %23 : vector<8x32xf32>
    %cst_20 = arith.constant 1.000000e+00 : f32
    %25 = vector.broadcast %cst_20 : f32 to vector<8x32xf32>
    %26 = arith.addf %25, %24 : vector<8x32xf32>
    %27 = arith.divf %25, %26 : vector<8x32xf32>
    %28 = vector.extract_strided_slice %21 {offsets = [0, 32], sizes = [8, 32], strides = [1, 1]} : vector<8x128xf32> to vector<8x32xf32>
    %29 = arith.negf %28 : vector<8x32xf32>
    %30 = math.exp %29 : vector<8x32xf32>
    %cst_21 = arith.constant 1.000000e+00 : f32
    %31 = vector.broadcast %cst_21 : f32 to vector<8x32xf32>
    %32 = arith.addf %31, %30 : vector<8x32xf32>
    %33 = arith.divf %31, %32 : vector<8x32xf32>
    %34 = vector.extract_strided_slice %21 {offsets = [0, 64], sizes = [8, 32], strides = [1, 1]} : vector<8x128xf32> to vector<8x32xf32>
    %35 = math.tanh %34 : vector<8x32xf32>
    %36 = vector.extract_strided_slice %21 {offsets = [0, 96], sizes = [8, 32], strides = [1, 1]} : vector<8x128xf32> to vector<8x32xf32>
    %37 = arith.negf %36 : vector<8x32xf32>
    %38 = math.exp %37 : vector<8x32xf32>
    %cst_22 = arith.constant 1.000000e+00 : f32
    %39 = vector.broadcast %cst_22 : f32 to vector<8x32xf32>
    %40 = arith.addf %39, %38 : vector<8x32xf32>
    %41 = arith.divf %39, %40 : vector<8x32xf32>
    %42 = arith.mulf %33, %15 : vector<8x32xf32>
    %43 = arith.mulf %27, %35 : vector<8x32xf32>
    %44 = arith.addf %42, %43 : vector<8x32xf32>
    %45 = math.tanh %44 : vector<8x32xf32>
    %46 = arith.mulf %41, %45 : vector<8x32xf32>
    %47 = arith.index_cast %c0_i32_16 : i32 to index
    %c0_23 = arith.constant 0 : index
    %c0_24 = arith.constant 0 : index
    %48 = vector.load %arg10[%47, %c0_23, %c0_24] : memref<4x8x32xf32, #tpu.memory_space<vmem>>, vector<1x8x32xf32>
    %49 = vector.shape_cast %48 : vector<1x8x32xf32> to vector<8x32xf32>
    %50 = vector.shape_cast %46 : vector<8x32xf32> to vector<1x8x32xf32>
    tpu.vector_store %arg10[%47, %c0_23, %c0_24], %50 {strides = array<i32>} : memref<4x8x32xf32, #tpu.memory_space<vmem>>, vector<1x8x32xf32>,
    %c1_i32 = arith.constant 1 : i32
    %51 = arith.index_cast %c1_i32 : i32 to index
    %c0_25 = arith.constant 0 : index
    %c0_26 = arith.constant 0 : index
    %52 = vector.load %arg9[%51, %c0_25, %c0_26] : memref<4x8x128xf32, #tpu.memory_space<vmem>>, vector<1x8x128xf32>
    %53 = vector.shape_cast %52 : vector<1x8x128xf32> to vector<8x128xf32>
    %54 = arith.truncf %46 : vector<8x32xf32> to vector<8x32xbf16>
    %cst_27 = arith.constant dense<0.000000e+00> : vector<8x128xf32>
    %55 = tpu.matmul %54, %4, %cst_27 {dimension_numbers = #tpu.dot_dimension_numbers<[1], [0], [0], [1], [0, 0, 1, 1], [], []>} : vector<8x32xbf16>, vector<32x128xbf16>, vector<8x128xf32> -> vector<8x128xf32>
    %56 = arith.addf %53, %55 : vector<8x128xf32>
    %57 = vector.extract_strided_slice %56 {offsets = [0, 0], sizes = [8, 32], strides = [1, 1]} : vector<8x128xf32> to vector<8x32xf32>
    %58 = arith.negf %57 : vector<8x32xf32>
    %59 = math.exp %58 : vector<8x32xf32>
    %cst_28 = arith.constant 1.000000e+00 : f32
    %60 = vector.broadcast %cst_28 : f32 to vector<8x32xf32>
    %61 = arith.addf %60, %59 : vector<8x32xf32>
    %62 = arith.divf %60, %61 : vector<8x32xf32>
    %63 = vector.extract_strided_slice %56 {offsets = [0, 32], sizes = [8, 32], strides = [1, 1]} : vector<8x128xf32> to vector<8x32xf32>
    %64 = arith.negf %63 : vector<8x32xf32>
    %65 = math.exp %64 : vector<8x32xf32>
    %cst_29 = arith.constant 1.000000e+00 : f32
    %66 = vector.broadcast %cst_29 : f32 to vector<8x32xf32>
    %67 = arith.addf %66, %65 : vector<8x32xf32>
    %68 = arith.divf %66, %67 : vector<8x32xf32>
    %69 = vector.extract_strided_slice %56 {offsets = [0, 64], sizes = [8, 32], strides = [1, 1]} : vector<8x128xf32> to vector<8x32xf32>
    %70 = math.tanh %69 : vector<8x32xf32>
    %71 = vector.extract_strided_slice %56 {offsets = [0, 96], sizes = [8, 32], strides = [1, 1]} : vector<8x128xf32> to vector<8x32xf32>
    %72 = arith.negf %71 : vector<8x32xf32>
    %73 = math.exp %72 : vector<8x32xf32>
    %cst_30 = arith.constant 1.000000e+00 : f32
    %74 = vector.broadcast %cst_30 : f32 to vector<8x32xf32>
    %75 = arith.addf %74, %73 : vector<8x32xf32>
    %76 = arith.divf %74, %75 : vector<8x32xf32>
    %77 = arith.mulf %68, %44 : vector<8x32xf32>
    %78 = arith.mulf %62, %70 : vector<8x32xf32>
    %79 = arith.addf %77, %78 : vector<8x32xf32>
    %80 = math.tanh %79 : vector<8x32xf32>
    %81 = arith.mulf %76, %80 : vector<8x32xf32>
    %82 = arith.index_cast %c1_i32 : i32 to index
    %c0_31 = arith.constant 0 : index
    %c0_32 = arith.constant 0 : index
    %83 = vector.load %arg10[%82, %c0_31, %c0_32] : memref<4x8x32xf32, #tpu.memory_space<vmem>>, vector<1x8x32xf32>
    %84 = vector.shape_cast %83 : vector<1x8x32xf32> to vector<8x32xf32>
    %85 = vector.shape_cast %81 : vector<8x32xf32> to vector<1x8x32xf32>
    tpu.vector_store %arg10[%82, %c0_31, %c0_32], %85 {strides = array<i32>} : memref<4x8x32xf32, #tpu.memory_space<vmem>>, vector<1x8x32xf32>,
    %c2_i32 = arith.constant 2 : i32
    %86 = arith.index_cast %c2_i32 : i32 to index
    %c0_33 = arith.constant 0 : index
    %c0_34 = arith.constant 0 : index
    %87 = vector.load %arg9[%86, %c0_33, %c0_34] : memref<4x8x128xf32, #tpu.memory_space<vmem>>, vector<1x8x128xf32>
    %88 = vector.shape_cast %87 : vector<1x8x128xf32> to vector<8x128xf32>
    %89 = arith.truncf %81 : vector<8x32xf32> to vector<8x32xbf16>
    %cst_35 = arith.constant dense<0.000000e+00> : vector<8x128xf32>
    %90 = tpu.matmul %89, %4, %cst_35 {dimension_numbers = #tpu.dot_dimension_numbers<[1], [0], [0], [1], [0, 0, 1, 1], [], []>} : vector<8x32xbf16>, vector<32x128xbf16>, vector<8x128xf32> -> vector<8x128xf32>
    %91 = arith.addf %88, %90 : vector<8x128xf32>
    %92 = vector.extract_strided_slice %91 {offsets = [0, 0], sizes = [8, 32], strides = [1, 1]} : vector<8x128xf32> to vector<8x32xf32>
    %93 = arith.negf %92 : vector<8x32xf32>
    %94 = math.exp %93 : vector<8x32xf32>
    %cst_36 = arith.constant 1.000000e+00 : f32
    %95 = vector.broadcast %cst_36 : f32 to vector<8x32xf32>
    %96 = arith.addf %95, %94 : vector<8x32xf32>
    %97 = arith.divf %95, %96 : vector<8x32xf32>
    %98 = vector.extract_strided_slice %91 {offsets = [0, 32], sizes = [8, 32], strides = [1, 1]} : vector<8x128xf32> to vector<8x32xf32>
    %99 = arith.negf %98 : vector<8x32xf32>
    %100 = math.exp %99 : vector<8x32xf32>
    %cst_37 = arith.constant 1.000000e+00 : f32
    %101 = vector.broadcast %cst_37 : f32 to vector<8x32xf32>
    %102 = arith.addf %101, %100 : vector<8x32xf32>
    %103 = arith.divf %101, %102 : vector<8x32xf32>
    %104 = vector.extract_strided_slice %91 {offsets = [0, 64], sizes = [8, 32], strides = [1, 1]} : vector<8x128xf32> to vector<8x32xf32>
    %105 = math.tanh %104 : vector<8x32xf32>
    %106 = vector.extract_strided_slice %91 {offsets = [0, 96], sizes = [8, 32], strides = [1, 1]} : vector<8x128xf32> to vector<8x32xf32>
    %107 = arith.negf %106 : vector<8x32xf32>
    %108 = math.exp %107 : vector<8x32xf32>
    %cst_38 = arith.constant 1.000000e+00 : f32
    %109 = vector.broadcast %cst_38 : f32 to vector<8x32xf32>
    %110 = arith.addf %109, %108 : vector<8x32xf32>
    %111 = arith.divf %109, %110 : vector<8x32xf32>
    %112 = arith.mulf %103, %79 : vector<8x32xf32>
    %113 = arith.mulf %97, %105 : vector<8x32xf32>
    %114 = arith.addf %112, %113 : vector<8x32xf32>
    %115 = math.tanh %114 : vector<8x32xf32>
    %116 = arith.mulf %111, %115 : vector<8x32xf32>
    %117 = arith.index_cast %c2_i32 : i32 to index
    %c0_39 = arith.constant 0 : index
    %c0_40 = arith.constant 0 : index
    %118 = vector.load %arg10[%117, %c0_39, %c0_40] : memref<4x8x32xf32, #tpu.memory_space<vmem>>, vector<1x8x32xf32>
    %119 = vector.shape_cast %118 : vector<1x8x32xf32> to vector<8x32xf32>
    %120 = vector.shape_cast %116 : vector<8x32xf32> to vector<1x8x32xf32>
    tpu.vector_store %arg10[%117, %c0_39, %c0_40], %120 {strides = array<i32>} : memref<4x8x32xf32, #tpu.memory_space<vmem>>, vector<1x8x32xf32>,
    %c3_i32 = arith.constant 3 : i32
    %121 = arith.index_cast %c3_i32 : i32 to index
    %c0_41 = arith.constant 0 : index
    %c0_42 = arith.constant 0 : index
    %122 = vector.load %arg9[%121, %c0_41, %c0_42] : memref<4x8x128xf32, #tpu.memory_space<vmem>>, vector<1x8x128xf32>
    %123 = vector.shape_cast %122 : vector<1x8x128xf32> to vector<8x128xf32>
    %124 = arith.truncf %116 : vector<8x32xf32> to vector<8x32xbf16>
    %cst_43 = arith.constant dense<0.000000e+00> : vector<8x128xf32>
    %125 = tpu.matmul %124, %4, %cst_43 {dimension_numbers = #tpu.dot_dimension_numbers<[1], [0], [0], [1], [0, 0, 1, 1], [], []>} : vector<8x32xbf16>, vector<32x128xbf16>, vector<8x128xf32> -> vector<8x128xf32>
    %126 = arith.addf %123, %125 : vector<8x128xf32>
    %127 = vector.extract_strided_slice %126 {offsets = [0, 0], sizes = [8, 32], strides = [1, 1]} : vector<8x128xf32> to vector<8x32xf32>
    %128 = arith.negf %127 : vector<8x32xf32>
    %129 = math.exp %128 : vector<8x32xf32>
    %cst_44 = arith.constant 1.000000e+00 : f32
    %130 = vector.broadcast %cst_44 : f32 to vector<8x32xf32>
    %131 = arith.addf %130, %129 : vector<8x32xf32>
    %132 = arith.divf %130, %131 : vector<8x32xf32>
    %133 = vector.extract_strided_slice %126 {offsets = [0, 32], sizes = [8, 32], strides = [1, 1]} : vector<8x128xf32> to vector<8x32xf32>
    %134 = arith.negf %133 : vector<8x32xf32>
    %135 = math.exp %134 : vector<8x32xf32>
    %cst_45 = arith.constant 1.000000e+00 : f32
    %136 = vector.broadcast %cst_45 : f32 to vector<8x32xf32>
    %137 = arith.addf %136, %135 : vector<8x32xf32>
    %138 = arith.divf %136, %137 : vector<8x32xf32>
    %139 = vector.extract_strided_slice %126 {offsets = [0, 64], sizes = [8, 32], strides = [1, 1]} : vector<8x128xf32> to vector<8x32xf32>
    %140 = math.tanh %139 : vector<8x32xf32>
    %141 = vector.extract_strided_slice %126 {offsets = [0, 96], sizes = [8, 32], strides = [1, 1]} : vector<8x128xf32> to vector<8x32xf32>
    %142 = arith.negf %141 : vector<8x32xf32>
    %143 = math.exp %142 : vector<8x32xf32>
    %cst_46 = arith.constant 1.000000e+00 : f32
    %144 = vector.broadcast %cst_46 : f32 to vector<8x32xf32>
    %145 = arith.addf %144, %143 : vector<8x32xf32>
    %146 = arith.divf %144, %145 : vector<8x32xf32>
    %147 = arith.mulf %138, %114 : vector<8x32xf32>
    %148 = arith.mulf %132, %140 : vector<8x32xf32>
    %149 = arith.addf %147, %148 : vector<8x32xf32>
    %150 = math.tanh %149 : vector<8x32xf32>
    %151 = arith.mulf %146, %150 : vector<8x32xf32>
    %152 = arith.index_cast %c3_i32 : i32 to index
    %c0_47 = arith.constant 0 : index
    %c0_48 = arith.constant 0 : index
    %153 = vector.load %arg10[%152, %c0_47, %c0_48] : memref<4x8x32xf32, #tpu.memory_space<vmem>>, vector<1x8x32xf32>
    %154 = vector.shape_cast %153 : vector<1x8x32xf32> to vector<8x32xf32>
    %155 = vector.shape_cast %151 : vector<8x32xf32> to vector<1x8x32xf32>
    tpu.vector_store %arg10[%152, %c0_47, %c0_48], %155 {strides = array<i32>} : memref<4x8x32xf32, #tpu.memory_space<vmem>>, vector<1x8x32xf32>,
    %c4_i32 = arith.constant 4 : i32
    %c0_49 = arith.constant 0 : index
    %c0_50 = arith.constant 0 : index
    %156 = vector.load %arg11[%c0_49, %c0_50] : memref<8x32xf32, #tpu.memory_space<vmem>>, vector<8x32xf32>
    tpu.vector_store %arg11[%c0_49, %c0_50], %151 {strides = array<i32>} : memref<8x32xf32, #tpu.memory_space<vmem>>, vector<8x32xf32>,
    %c0_51 = arith.constant 0 : index
    %c0_52 = arith.constant 0 : index
    %157 = vector.load %arg12[%c0_51, %c0_52] : memref<8x32xf32, #tpu.memory_space<vmem>>, vector<8x32xf32>
    tpu.vector_store %arg12[%c0_51, %c0_52], %149 {strides = array<i32>} : memref<8x32xf32, #tpu.memory_space<vmem>>, vector<8x32xf32>,
    %c0_53 = arith.constant 0 : index
    %c0_54 = arith.constant 0 : index
    %c0_55 = arith.constant 0 : index
    %158 = vector.load %arg10[%c0_53, %c0_54, %c0_55] : memref<4x8x32xf32, #tpu.memory_space<vmem>>, vector<4x8x32xf32>
    %159 = vector.shape_cast %158 : vector<4x8x32xf32> to vector<32x32xf32>
    %160 = arith.truncf %159 : vector<32x32xf32> to vector<32x32xbf16>
    %c0_56 = arith.constant 0 : index
    %c0_57 = arith.constant 0 : index
    %161 = vector.load %arg5[%c0_56, %c0_57] : memref<32x8xbf16, #tpu.memory_space<vmem>>, vector<32x8xbf16>
    %cst_58 = arith.constant dense<0.000000e+00> : vector<32x8xf32>
    %162 = tpu.matmul %160, %161, %cst_58 {dimension_numbers = #tpu.dot_dimension_numbers<[1], [0], [0], [1], [0, 0, 1, 1], [], []>} : vector<32x32xbf16>, vector<32x8xbf16>, vector<32x8xf32> -> vector<32x8xf32>
    %c0_59 = arith.constant 0 : index
    %c0_60 = arith.constant 0 : index
    %163 = vector.load %arg7[%c0_59, %c0_60] : memref<1x8xf32, #tpu.memory_space<vmem>>, vector<1x8xf32>
    %164 = vector.broadcast %163 : vector<1x8xf32> to vector<32x8xf32>
    %165 = arith.addf %162, %164 : vector<32x8xf32>
    %166 = vector.shape_cast %165 : vector<32x8xf32> to vector<4x8x8xf32>
    %c0_61 = arith.constant 0 : index
    %c0_62 = arith.constant 0 : index
    %c0_63 = arith.constant 0 : index
    %167 = vector.load %arg8[%c0_61, %c0_62, %c0_63] : memref<4x8x8xf32, #tpu.memory_space<vmem>>, vector<4x8x8xf32>
    tpu.vector_store %arg8[%c0_61, %c0_62, %c0_63], %166 {strides = array<i32>} : memref<4x8x8xf32, #tpu.memory_space<vmem>>, vector<4x8x8xf32>,
    return
  }
  func.func @transform_0(%arg0: i32, %arg1: i32) -> (i32, i32, i32) {
    %c0_i32 = arith.constant 0 : i32
    %c0_i32_0 = arith.constant 0 : i32
    return %arg1, %arg0, %c0_i32 : i32, i32, i32
  }
  func.func @transform_1(%arg0: i32, %arg1: i32) -> (i32, i32) {
    %c0_i32 = arith.constant 0 : i32
    %c0_i32_0 = arith.constant 0 : i32
    %c0_i32_1 = arith.constant 0 : i32
    return %c0_i32, %c0_i32_0 : i32, i32
  }
  func.func @transform_2(%arg0: i32, %arg1: i32) -> (i32, i32) {
    %c0_i32 = arith.constant 0 : i32
    %c0_i32_0 = arith.constant 0 : i32
    %c0_i32_1 = arith.constant 0 : i32
    return %c0_i32, %c0_i32_0 : i32, i32
  }
  func.func @transform_3(%arg0: i32, %arg1: i32) -> (i32, i32) {
    %c0_i32 = arith.constant 0 : i32
    %c0_i32_0 = arith.constant 0 : i32
    %c0_i32_1 = arith.constant 0 : i32
    return %c0_i32, %c0_i32_0 : i32, i32
  }
  func.func @transform_4(%arg0: i32, %arg1: i32) -> (i32, i32) {
    %c0_i32 = arith.constant 0 : i32
    %c0_i32_0 = arith.constant 0 : i32
    %c0_i32_1 = arith.constant 0 : i32
    return %c0_i32, %c0_i32_0 : i32, i32
  }
  func.func @transform_5(%arg0: i32, %arg1: i32) -> (i32, i32) {
    %c0_i32 = arith.constant 0 : i32
    %c0_i32_0 = arith.constant 0 : i32
    %c0_i32_1 = arith.constant 0 : i32
    return %c0_i32, %c0_i32_0 : i32, i32
  }
  func.func @transform_6(%arg0: i32, %arg1: i32) -> (i32, i32, i32) {
    %c0_i32 = arith.constant 0 : i32
    %c0_i32_0 = arith.constant 0 : i32
    return %arg1, %arg0, %c0_i32 : i32, i32, i32
  }
}

</mosaic_0001>

<llo_original>
// kernel: tpu_custom_call.1
$region0: #{tpu_custom_call.1}
  #allocation0 [shape = 'u32[]', space=smem, size = 0x4, offset = 0x4, fixed_abs, tag = 'smem constant byte address 0x4 - core index']
  #allocation1 [shape = 'u32[144,128]{1,0:T(1,128)}', space=vmem, size = 0x12000, scoped, tag = 'internal scratch']
  #allocation2 [shape = 'f32[4,8,128]{2,1,0:T(8,128)}', space=vmem, size = 0x4000, scoped, tag = 'scratch operand']
  #allocation3 [shape = 'f32[4,8,32]{2,1,0:T(8,128)}', space=vmem, size = 0x4000, scoped, tag = 'scratch operand']
  #allocation4 [shape = 'f32[8,32]{1,0:T(8,128)}', space=vmem, size = 0x1000, scoped, tag = 'scratch operand']
  #allocation5 [shape = 'f32[8,32]{1,0:T(8,128)}', space=vmem, size = 0x1000, scoped, tag = 'scratch operand']
  %s0 = inlined_call_operand.hbm [shape: f32[8,8,8], index: 0, kind: input, shape index: {}]
  %s1 = inlined_call_operand.vmem [shape: bf16[8,128], index: 1, kind: input, shape index: {}]
  %s2 = inlined_call_operand.vmem [shape: bf16[32,128], index: 2, kind: input, shape index: {}]
  %s3 = inlined_call_operand.vmem [shape: bf16[32,8], index: 3, kind: input, shape index: {}]
  %s4 = inlined_call_operand.vmem [shape: f32[1,128], index: 4, kind: input, shape index: {}]
  %s5 = inlined_call_operand.vmem [shape: f32[1,8], index: 5, kind: input, shape index: {}]
  %s6 = inlined_call_operand.hbm [shape: f32[8,8,8], index: 6, kind: output, shape index: {}]
  %s7 = sld [smem:[#allocation0]]
  $region65: #{tpu_custom_call.1} parent=0
    _
  %s9 = ssub.s32 1, %s7
  %s10 = scalar_select 0, %s9, %s7
  $region1: #{tpu_custom_call.1} parent=0
    #allocation6 [shape = 'u8[32768]{0}', space=vmem, size = 0x8000, scoped, tag = 'input window, operand 0']
    #allocation7 [shape = 's32[2]{0}', space=sflag, size = 0x8, scoped, tag = 'scoped memory for tpu_custom_call.1']
    #allocation8 [shape = 's32[2]{0}', space=sflag, size = 0x8, scoped, tag = 'scoped memory for tpu_custom_call.1']
    #allocation9 [shape = 'u8[32768]{0}', space=vmem, size = 0x8000, scoped, tag = 'output window, operand 0']
    %11 = vsyncpa [#allocation7], 0
    %s12 = scalar_lea.sflag [#allocation7], 1
    %13 = vsyncpa %s12, 0
    %14 = vsyncpa [#allocation8], 0
    %s15 = scalar_lea.sflag [#allocation8], 1
    %16 = vsyncpa %s15, 0
    loop: start=0, step=1, limit=4
    $region2: #{tpu_custom_call.1} parent=1 // loop_pre_header
      _
    $region3: #{tpu_custom_call.1} parent=1 // loop_header
      %s18 = sphi 0, %s22
      %p19 = scmp.ge.s32.totalorder %s18, 4
      %s25 = sphi 0, %s37
      %s26 = sphi 0, %s33
      %s27 = sphi 0, %s25
      %s28 = sphi 0, %s26
      %s29 = sphi 0, %s27
      %s30 = sphi 0, %s28
      %s42 = sphi 0, %s44
      %s45 = sphi 0, %s42
      %s46 = sphi 0, %s45
      %s62 = sphi 0, %s46
      %s66 = sphi 0, %s66
      %s68 = sphi 0, %s66
      %s69 = sphi 0, %s68
      %s83 = sphi 0, %s69
      %s87 = sphi 0, %s87
      %s89 = sphi 0, %s87
      %s90 = sphi 0, %s89
      %s104 = sphi 0, %s90
      %s108 = sphi 0, %s108
      %s110 = sphi 0, %s108
      %s111 = sphi 0, %s110
      %s125 = sphi 0, %s111
      %s129 = sphi 0, %s129
      %s131 = sphi 0, %s129
      %s132 = sphi 0, %s131
      %s146 = sphi 0, %s132
      %s150 = sphi 0, %s150
      %s152 = sphi 0, %s150
      %s153 = sphi 0, %s152
      %s167 = sphi 0, %s153
      %s175 = sphi 0, %s177
      %s178 = sphi 0, %s175
      %s179 = sphi 0, %s178
      %s195 = sphi 0, %s179
    $region4: #{tpu_custom_call.1} parent=1 // loop_header_branch
      %21 = sbr.rel (%p19) target = $region8
    $region5: #{tpu_custom_call.1} parent=1 // loop_body
      %s23 = ssub.s32 %s18, 1
      %s24 = ssub.s32 %s18, 2
      %s31 = sadd.s32 1, %s26
      %p32 = scmp.ge.s32.totalorder %s31, 2
      %s33 = scalar_select %p32, 0, %s31
      %s34 = sadd.s32 1, %s25
      %s35 = scalar_select %p32, %s34, %s25
      %p36 = scmp.ge.s32.totalorder %s35, 1
      %s37 = scalar_select %p36, 0, %s35
      %s38 = ssub.s32 %s26, %s33
      %s39 = ssub.s32 %s25, %s37
      %s40 = sor.u32 %s38, %s39
      %p41 = scmp.eq.s32.totalorder %s40, 0
      %s43 = sadd.s32 %s42, 1
      %s44 = scalar_select %p41, %s42, %s43
      %p47 = pneg %p41
      %p48 = scmp.eq.s32.totalorder %s18, 1
      %p49 = por %p47, %p48
      %p50 = scmp.ne.s32.totalorder %s42, %s45
      %p51 = scmp.eq.s32.totalorder %s18, 0
      %p52 = por %p50, %p51
      %p53 = scmp.ne.s32.totalorder %s42, %s45
      %p54 = scmp.eq.s32.totalorder %s23, 1
      %p55 = por %p53, %p54
      %p56 = scmp.ne.s32.totalorder %s45, %s46
      %p57 = scmp.eq.s32.totalorder %s23, 0
      %p58 = por %p56, %p57
      %p59 = scmp.ne.s32.totalorder %s45, %s46
      %p60 = scmp.eq.s32.totalorder %s24, 1
      %p61 = por %p59, %p60
      %p63 = scmp.ne.s32.totalorder %s46, %s62
      %p64 = scmp.eq.s32.totalorder %s24, 0
      %p65 = por %p63, %p64
      %s67 = sadd.s32 %s66, 1
      %p70 = scmp.eq.s32.totalorder %s18, 1
      %p71 = scmp.ne.s32.totalorder %s66, %s68
      %p72 = scmp.eq.s32.totalorder %s18, 0
      %p73 = por %p71, %p72
      %p74 = scmp.ne.s32.totalorder %s66, %s68
      %p75 = scmp.eq.s32.totalorder %s23, 1
      %p76 = por %p74, %p75
      %p77 = scmp.ne.s32.totalorder %s68, %s69
      %p78 = scmp.eq.s32.totalorder %s23, 0
      %p79 = por %p77, %p78
      %p80 = scmp.ne.s32.totalorder %s68, %s69
      %p81 = scmp.eq.s32.totalorder %s24, 1
      %p82 = por %p80, %p81
      %p84 = scmp.ne.s32.totalorder %s69, %s83
      %p85 = scmp.eq.s32.totalorder %s24, 0
      %p86 = por %p84, %p85
      %s88 = sadd.s32 %s87, 1
      %p91 = scmp.eq.s32.totalorder %s18, 1
      %p92 = scmp.ne.s32.totalorder %s87, %s89
      %p93 = scmp.eq.s32.totalorder %s18, 0
      %p94 = por %p92, %p93
      %p95 = scmp.ne.s32.totalorder %s87, %s89
      %p96 = scmp.eq.s32.totalorder %s23, 1
      %p97 = por %p95, %p96
      %p98 = scmp.ne.s32.totalorder %s89, %s90
      %p99 = scmp.eq.s32.totalorder %s23, 0
      %p100 = por %p98, %p99
      %p101 = scmp.ne.s32.totalorder %s89, %s90
      %p102 = scmp.eq.s32.totalorder %s24, 1
      %p103 = por %p101, %p102
      %p105 = scmp.ne.s32.totalorder %s90, %s104
      %p106 = scmp.eq.s32.totalorder %s24, 0
      %p107 = por %p105, %p106
      %s109 = sadd.s32 %s108, 1
      %p112 = scmp.eq.s32.totalorder %s18, 1
      %p113 = scmp.ne.s32.totalorder %s108, %s110
      %p114 = scmp.eq.s32.totalorder %s18, 0
      %p115 = por %p113, %p114
      %p116 = scmp.ne.s32.totalorder %s108, %s110
      %p117 = scmp.eq.s32.totalorder %s23, 1
      %p118 = por %p116, %p117
      %p119 = scmp.ne.s32.totalorder %s110, %s111
      %p120 = scmp.eq.s32.totalorder %s23, 0
      %p121 = por %p119, %p120
      %p122 = scmp.ne.s32.totalorder %s110, %s111
      %p123 = scmp.eq.s32.totalorder %s24, 1
      %p124 = por %p122, %p123
      %p126 = scmp.ne.s32.totalorder %s111, %s125
      %p127 = scmp.eq.s32.totalorder %s24, 0
      %p128 = por %p126, %p127
      %s130 = sadd.s32 %s129, 1
      %p133 = scmp.eq.s32.totalorder %s18, 1
      %p134 = scmp.ne.s32.totalorder %s129, %s131
      %p135 = scmp.eq.s32.totalorder %s18, 0
      %p136 = por %p134, %p135
      %p137 = scmp.ne.s32.totalorder %s129, %s131
      %p138 = scmp.eq.s32.totalorder %s23, 1
      %p139 = por %p137, %p138
      %p140 = scmp.ne.s32.totalorder %s131, %s132
      %p141 = scmp.eq.s32.totalorder %s23, 0
      %p142 = por %p140, %p141
      %p143 = scmp.ne.s32.totalorder %s131, %s132
      %p144 = scmp.eq.s32.totalorder %s24, 1
      %p145 = por %p143, %p144
      %p147 = scmp.ne.s32.totalorder %s132, %s146
      %p148 = scmp.eq.s32.totalorder %s24, 0
      %p149 = por %p147, %p148
      %s151 = sadd.s32 %s150, 1
      %p154 = scmp.eq.s32.totalorder %s18, 1
      %p155 = scmp.ne.s32.totalorder %s150, %s152
      %p156 = scmp.eq.s32.totalorder %s18, 0
      %p157 = por %p155, %p156
      %p158 = scmp.ne.s32.totalorder %s150, %s152
      %p159 = scmp.eq.s32.totalorder %s23, 1
      %p160 = por %p158, %p159
      %p161 = scmp.ne.s32.totalorder %s152, %s153
      %p162 = scmp.eq.s32.totalorder %s23, 0
      %p163 = por %p161, %p162
      %p164 = scmp.ne.s32.totalorder %s152, %s153
      %p165 = scmp.eq.s32.totalorder %s24, 1
      %p166 = por %p164, %p165
      %p168 = scmp.ne.s32.totalorder %s153, %s167
      %p169 = scmp.eq.s32.totalorder %s24, 0
      %p170 = por %p168, %p169
      %s171 = ssub.s32 %s26, %s33
      %s172 = ssub.s32 %s25, %s37
      %s173 = sor.u32 %s171, %s172
      %p174 = scmp.eq.s32.totalorder %s173, 0
      %s176 = sadd.s32 %s175, 1
      %s177 = scalar_select %p174, %s175, %s176
      %p180 = pneg %p174
      %p181 = scmp.eq.s32.totalorder %s18, 1
      %p182 = por %p180, %p181
      %p183 = scmp.ne.s32.totalorder %s175, %s178
      %p184 = scmp.eq.s32.totalorder %s18, 0
      %p185 = por %p183, %p184
      %p186 = scmp.ne.s32.totalorder %s175, %s178
      %p187 = scmp.eq.s32.totalorder %s23, 1
      %p188 = por %p186, %p187
      %p189 = scmp.ne.s32.totalorder %s178, %s179
      %p190 = scmp.eq.s32.totalorder %s23, 0
      %p191 = por %p189, %p190
      %p192 = scmp.ne.s32.totalorder %s178, %s179
      %p193 = scmp.eq.s32.totalorder %s24, 1
      %p194 = por %p192, %p193
      %p196 = scmp.ne.s32.totalorder %s179, %s195
      %p197 = scmp.eq.s32.totalorder %s24, 0
      %p198 = por %p196, %p197
      %p199 = scmp.le.s32.totalorder 1, %s18
      %p200 = scmp.lt.s32.totalorder %s18, 3
      %p201 = pnand %p199, %p200
      %p202 = pneg %p201
      // Predicated region
      $region9: #{tpu_custom_call.1} parent=5 // pred_check
        _
      $region10: #{tpu_custom_call.1} parent=5 // pred_check_branch
        %204 = sbr.rel (%p201) target = $region12
      $region11: #{tpu_custom_call.1} parent=5 // pred_region
        %s205 = ssub.s32 %s18, 1
        // Predicated region
        $region13: #{tpu_custom_call.1} parent=11 // pred_check
          %p206 = pneg %p79
        $region14: #{tpu_custom_call.1} parent=11 // pred_check_branch
          %208 = sbr.rel (%p206) target = $region16
        $region15: #{tpu_custom_call.1} parent=11 // pred_region
          _
        $region16: #{tpu_custom_call.1} parent=11 // pred_fallthru
          _
        // Predicated region
        $region17: #{tpu_custom_call.1} parent=11 // pred_check
          %p209 = pneg %p100
        $region18: #{tpu_custom_call.1} parent=11 // pred_check_branch
          %211 = sbr.rel (%p209) target = $region20
        $region19: #{tpu_custom_call.1} parent=11 // pred_region
          _
        $region20: #{tpu_custom_call.1} parent=11 // pred_fallthru
          _
        // Predicated region
        $region21: #{tpu_custom_call.1} parent=11 // pred_check
          %p212 = pneg %p121
        $region22: #{tpu_custom_call.1} parent=11 // pred_check_branch
          %214 = sbr.rel (%p212) target = $region24
        $region23: #{tpu_custom_call.1} parent=11 // pred_region
          _
        $region24: #{tpu_custom_call.1} parent=11 // pred_fallthru
          _
        // Predicated region
        $region25: #{tpu_custom_call.1} parent=11 // pred_check
          %p215 = pneg %p142
        $region26: #{tpu_custom_call.1} parent=11 // pred_check_branch
          %217 = sbr.rel (%p215) target = $region28
        $region27: #{tpu_custom_call.1} parent=11 // pred_region
          _
        $region28: #{tpu_custom_call.1} parent=11 // pred_fallthru
          _
        // Predicated region
        $region29: #{tpu_custom_call.1} parent=11 // pred_check
          %p218 = pneg %p163
        $region30: #{tpu_custom_call.1} parent=11 // pred_check_branch
          %220 = sbr.rel (%p218) target = $region32
        $region31: #{tpu_custom_call.1} parent=11 // pred_region
          _
        $region32: #{tpu_custom_call.1} parent=11 // pred_fallthru
          _
      $region12: #{tpu_custom_call.1} parent=5 // pred_fallthru
        _
      %p221 = scmp.lt.s32.totalorder %s18, 2
      // Predicated region
      $region33: #{tpu_custom_call.1} parent=5 // pred_check
        %p222 = pneg %p221
      $region34: #{tpu_custom_call.1} parent=5 // pred_check_branch
        %224 = sbr.rel (%p222) target = $region36
      $region35: #{tpu_custom_call.1} parent=5 // pred_region
        // Predicated region
        $region37: #{tpu_custom_call.1} parent=35 // pred_check
          %p225 = pneg %p52
        $region38: #{tpu_custom_call.1} parent=35 // pred_check_branch
          %227 = sbr.rel (%p225) target = $region40
        $region39: #{tpu_custom_call.1} parent=35 // pred_region
          %s228 = sand.u32 %s42, 1
          %s229 = scalar_lea.sflag [#allocation7], %s228
          %s230 = sand.u32 %s42, 1
          %s231 = smul.addr %s230, 32
          %s232 = scalar_lea.vmem [#allocation6], %s231
          %s233 = smul.u32 4, %s26
          %s235 = ssub.s32 512, 512
          %236 = vsyncadd %s229, %s235
          %s237 = sadd.s32 %s25, %s233
          %s238 = smul.addr %s237, 128
          %s239 = scalar_lea.hbm %s0, %s238
          %s240 = sshll.u32 %s232, 4
          %s241 = int_to_ptr.vmem [resolvable:$true] %s240
          %246 = dma.hbm_to_vmem [thread:$0]  %s239, 512, %s241, %s229, 128, 128, 8
        $region40: #{tpu_custom_call.1} parent=35 // pred_fallthru
          _
      $region36: #{tpu_custom_call.1} parent=5 // pred_fallthru
        _
      %p247 = scmp.le.s32.totalorder 1, %s18
      %p248 = scmp.lt.s32.totalorder %s18, 3
      %p249 = pnand %p247, %p248
      %p250 = pneg %p249
      // Predicated region
      $region41: #{tpu_custom_call.1} parent=5 // pred_check
        _
      $region42: #{tpu_custom_call.1} parent=5 // pred_check_branch
        %252 = sbr.rel (%p249) target = $region44
      $region43: #{tpu_custom_call.1} parent=5 // pred_region
        %s253 = ssub.s32 %s18, 1
        %s254 = sand.u32 %s45, 1
        %s255 = scalar_lea.sflag [#allocation7], %s254
        %s256 = sand.u32 %s45, 1
        %s257 = smul.addr %s256, 32
        %s258 = scalar_lea.vmem [#allocation6], %s257
        // Predicated region
        $region45: #{tpu_custom_call.1} parent=43 // pred_check
          %p259 = pneg %p58
        $region46: #{tpu_custom_call.1} parent=43 // pred_check_branch
          %261 = sbr.rel (%p259) target = $region48
        $region47: #{tpu_custom_call.1} parent=43 // pred_region
          %262 = dma.done %s255, 512
        $region48: #{tpu_custom_call.1} parent=43 // pred_fallthru
          _
        %s263 = sand.u32 %s45, 1
        %s264 = scalar_lea.sflag [#allocation7], %s263
        %s265 = sand.u32 %s45, 1
        %s266 = smul.addr %s265, 32
        %s267 = scalar_lea.vmem [#allocation6], %s266
        %p268 = pneg %p58
        %p269 = pneg %p55
        %p270 = pneg %p79
        %p271 = pneg %p76
        %p272 = pneg %p100
        %p273 = pneg %p97
        %p274 = pneg %p121
        %p275 = pneg %p118
        %p276 = pneg %p142
        %p277 = pneg %p139
        %p278 = pneg %p163
        %p279 = pneg %p160
        %p280 = pneg %p191
        %p281 = pneg %p188
        %s282 = sand.u32 %s178, 1
        %s283 = scalar_lea.sflag [#allocation8], %s282
        %s284 = sand.u32 %s178, 1
        %s285 = smul.addr %s284, 32
        %s286 = scalar_lea.vmem [#allocation9], %s285
        %s287 = smul.u32 4, %s28
        %s288 = smul.u32 4, %s28
        %p290 = scmp.eq.s32.totalorder %s28, 0
        // Predicated region
        $region49: #{tpu_custom_call.1} parent=43 // pred_check
          %p291 = pneg %p290
        $region50: #{tpu_custom_call.1} parent=43 // pred_check_branch
          %293 = sbr.rel (%p291) target = $region52
        $region51: #{tpu_custom_call.1} parent=43 // pred_region
          %vm294 = vcmask 261120
          %295 = vst.msk [vmem:[#allocation4] sm:$0xff] %vm294, 0.0
          %296 = vst.msk [vmem:[#allocation5] sm:$0xff] %vm294, 0.0
        $region52: #{tpu_custom_call.1} parent=43 // pred_fallthru
          _
        %v297 = vld [vmem:[%s1] sm:$0xf]
        %v298 = vld [vmem:[%s2] sm:$0xf]
        %v299 = vld [vmem:[%s2 + $0x4] sm:$0xf]
        %v300 = vld [vmem:[%s2 + $0x8] sm:$0xf]
        %v301 = vld [vmem:[%s2 + $0xc] sm:$0xf]
        %v302 = vld [vmem:[%s258] sm:$0xff]
        %v303 = vld [vmem:[%s258 + $0x8] sm:$0xff]
        %v304 = vld [vmem:[%s258 + $0x10] sm:$0xff]
        %v305 = vld [vmem:[%s258 + $0x18] sm:$0xff]
        %v306 = vpack.c.bf16 %v303, %v302
        %v307 = vpack.c.bf16 %v305, %v304
        %v308 = vld [vmem:[%s4] sm:$0x1]
        %v310 = vlaneseq
        %v311 = vshrl.u32 %v310, 7
        %v312 = vsub.s32 0, %v311
        %v313 = vrot.slane %v308, %v312
        %vm315 = vcmask 64512
        %v317 = vsel %vm315, %v306, 0
        %v320 = vsel %vm315, %v307, 0
        %vm322 = vcmask 1043456
        %v324 = vsel %vm322, %v297, 0
        %326 = vmatprep.subr.bf16.mxu0 0
        %327 = vmatpush1.bf16.msra.mxu0 0
        %328 = vmatprep.subr.bf16.mxu0 0
        %329 = vmatpush1.bf16.msra.mxu0 0
        %330 = vmatprep.subr.bf16.mxu0 0
        %331 = vmatpush1.bf16.msra.mxu0 0
        %332 = vmatprep.subr.bf16.mxu0 0
        %333 = vmatpush1.bf16.msra.mxu0 0
        %334 = vmatprep.subr.bf16.mxu0 0
        %335 = vmatpush1.bf16.msra.mxu0 0
        %336 = vmatprep.subr.bf16.mxu0 0
        %337 = vmatpush1.bf16.msra.mxu0 0
        %338 = vmatprep.subr.bf16.mxu0 0
        %339 = vmatpush1.bf16.msra.mxu0 0
        %340 = vmatprep.subr.bf16.mxu0 0
        %341 = vmatpush1.bf16.msra.mxu0 %v324
        %342 = vmatprep.subr.bf16.mxu0 0
        %343 = vmatpush2.bf16.msra.mxu0 0
        %344 = vmatprep.subr.bf16.mxu0 0
        %345 = vmatpush2.bf16.msra.mxu0 0
        %346 = vmatprep.subr.bf16.mxu0 0
        %347 = vmatpush2.bf16.msra.mxu0 0
        %348 = vmatprep.subr.bf16.mxu0 0
        %349 = vmatpush2.bf16.msra.mxu0 0
        %350 = vmatprep.subr.bf16.mxu0 0
        %351 = vmatpush2.bf16.msra.mxu0 0
        %352 = vmatprep.subr.bf16.mxu0 0
        %353 = vmatpush2.bf16.msra.mxu0 0
        %354 = vmatprep.subr.bf16.mxu0 0
        %355 = vmatpush2.bf16.msra.mxu0 0
        %356 = vmatprep.subr.bf16.mxu0 0
        %357 = vmatpush2.bf16.msra.mxu0 0
        %358 = vmatprep.mubr.bf16.mxu0 0
        %359 = vmatmul.mubr.bf16.gmra.mxu0 %v317
        %v360 = vpop.f32.mrf.mxu0
        %v361 = vadd.f32 %v313, %v360
        %v362 = vpop.f32.mrf.mxu0
        %v363 = vpop.f32.mrf.mxu0
        %v364 = vadd.f32 %v313, %v363
        %v365 = vpop.f32.mrf.mxu0
        %366 = vmatprep.mubr.bf16.mxu0 0
        %367 = vmatmul.mubr.bf16.gmra.mxu0 %v320
        %v368 = vpop.f32.mrf.mxu0
        %v369 = vadd.f32 %v313, %v368
        %v370 = vpop.f32.mrf.mxu0
        %v371 = vpop.f32.mrf.mxu0
        %v372 = vadd.f32 %v313, %v371
        %v373 = vpop.f32.mrf.mxu0
        %374 = vdwg.mxu0
        %375 = vst [vmem:[#allocation2] sm:$0xff] %v361
        %376 = vst [vmem:[#allocation2 + $0x8] sm:$0xff] %v364
        %377 = vst [vmem:[#allocation2 + $0x10] sm:$0xff] %v369
        %378 = vst [vmem:[#allocation2 + $0x18] sm:$0xff] %v372
        %v379 = vld [vmem:[#allocation4] sm:$0xff]
        %v380 = vld [vmem:[#allocation5] sm:$0xff]
        %v381 = vld [vmem:[#allocation2] sm:$0xff]
        %v382 = vpack.c.bf16 %v379, %v379
        %v387 = vunpack.c.l.b16 %v298
        %v388 = vunpack.c.l.b16 %v299
        %v389 = vunpack.c.l.b16 %v300
        %v390 = vunpack.c.l.b16 %v301
        %v391 = vpack.c.b16 %v388, %v387
        %v392 = vpack.c.b16 %v390, %v389
        %vm395 = vcmask 261120
        %v397 = vsel %vm395, %v382, 0
        %399 = vmatprep.subr.bf16.mxu0 0
        %400 = vmatpush1.bf16.msra.mxu0 0
        %401 = vmatprep.subr.bf16.mxu0 0
        %402 = vmatpush1.bf16.msra.mxu0 0
        %403 = vmatprep.subr.bf16.mxu0 0
        %404 = vmatpush1.bf16.msra.mxu0 0
        %405 = vmatprep.subr.bf16.mxu0 0
        %406 = vmatpush1.bf16.msra.mxu0 0
        %407 = vmatprep.subr.bf16.mxu0 0
        %408 = vmatpush1.bf16.msra.mxu0 0
        %409 = vmatprep.subr.bf16.mxu0 0
        %410 = vmatpush1.bf16.msra.mxu0 0
        %411 = vmatprep.subr.bf16.mxu0 0
        %412 = vmatpush1.bf16.msra.mxu0 %v392
        %413 = vmatprep.subr.bf16.mxu0 0
        %414 = vmatpush1.bf16.msra.mxu0 %v391
        %415 = vmatprep.subr.bf16.mxu0 0
        %416 = vmatpush2.bf16.msra.mxu0 0
        %417 = vmatprep.subr.bf16.mxu0 0
        %418 = vmatpush2.bf16.msra.mxu0 0
        %419 = vmatprep.subr.bf16.mxu0 0
        %420 = vmatpush2.bf16.msra.mxu0 0
        %421 = vmatprep.subr.bf16.mxu0 0
        %422 = vmatpush2.bf16.msra.mxu0 0
        %423 = vmatprep.subr.bf16.mxu0 0
        %424 = vmatpush2.bf16.msra.mxu0 0
        %425 = vmatprep.subr.bf16.mxu0 0
        %426 = vmatpush2.bf16.msra.mxu0 0
        %427 = vmatprep.subr.bf16.mxu0 0
        %428 = vmatpush2.bf16.msra.mxu0 0
        %429 = vmatprep.subr.bf16.mxu0 0
        %430 = vmatpush2.bf16.msra.mxu0 0
        %431 = vmatprep.mubr.bf16.mxu0 0
        %432 = vmatmul.mubr.bf16.gmra.mxu0 %v397
        %v433 = vpop.f32.mrf.mxu0
        %v434 = vadd.f32 0.0, %v433
        %v435 = vpop.f32.mrf.mxu0
        %v436 = vpop.f32.mrf.mxu0
        %v437 = vpop.f32.mrf.mxu0
        %438 = vdwg.mxu0
        %v439 = vadd.f32 %v381, %v434
        %v440 = vxor.u32 %v439, 2147483648
        %v441 = vmul.f32 %v440, 1.442695
        %v442 = vpow.pop %v441
        %v443 = vadd.f32 %v442, 1.0
        %v444 = vrcp.pop %v443
        %v445 = vmul.f32 1.0, %v444
        %v446 = vtanh.pop %v439
        %448 = vrot.lane.b32.xlu0 %v380, 32
        %v449 = vpop.permute.xlu0 %448
        %v451 = vmul.f32 %v445, %v449
        %453 = vrot.lane.b32.xlu0 %v446, 64
        %v454 = vpop.permute.xlu0 %453
        %v456 = vmul.f32 %v445, %v454
        %458 = vrot.lane.b32.xlu0 %v456, 32
        %v459 = vpop.permute.xlu0 %458
        %v461 = vadd.f32 %v451, %v459
        %v462 = vtanh.pop %v461
        %464 = vrot.lane.b32.xlu0 %v462, 64
        %v465 = vpop.permute.xlu0 %464
        %v467 = vmul.f32 %v445, %v465
        %469 = vrot.lane.b32.xlu0 %v467, 32
        %v470 = vpop.permute.xlu0 %469
        %472 = vst.msk [vmem:[#allocation3] sm:$0xff] %vm395, %v470
        %s473 = scalar_lea.vmem [#allocation2], 8
        %v474 = vld [vmem:[%s473] sm:$0xff]
        %v475 = vpack.c.bf16 %v467, %v467
        %477 = vrot.lane.b32.xlu0 %v475, 32
        %v478 = vpop.permute.xlu0 %477
        %v480 = vsel %vm395, %v478, 0
        %482 = vmatprep.subr.bf16.mxu0 0
        %483 = vmatpush1.bf16.msra.mxu0 0
        %484 = vmatprep.subr.bf16.mxu0 0
        %485 = vmatpush1.bf16.msra.mxu0 0
        %486 = vmatprep.subr.bf16.mxu0 0
        %487 = vmatpush1.bf16.msra.mxu0 0
        %488 = vmatprep.subr.bf16.mxu0 0
        %489 = vmatpush1.bf16.msra.mxu0 0
        %490 = vmatprep.subr.bf16.mxu0 0
        %491 = vmatpush1.bf16.msra.mxu0 0
        %492 = vmatprep.subr.bf16.mxu0 0
        %493 = vmatpush1.bf16.msra.mxu0 0
        %494 = vmatprep.subr.bf16.mxu0 0
        %495 = vmatpush1.bf16.msra.mxu0 %v392
        %496 = vmatprep.subr.bf16.mxu0 0
        %497 = vmatpush1.bf16.msra.mxu0 %v391
        %498 = vmatprep.subr.bf16.mxu0 0
        %499 = vmatpush2.bf16.msra.mxu0 0
        %500 = vmatprep.subr.bf16.mxu0 0
        %501 = vmatpush2.bf16.msra.mxu0 0
        %502 = vmatprep.subr.bf16.mxu0 0
        %503 = vmatpush2.bf16.msra.mxu0 0
        %504 = vmatprep.subr.bf16.mxu0 0
        %505 = vmatpush2.bf16.msra.mxu0 0
        %506 = vmatprep.subr.bf16.mxu0 0
        %507 = vmatpush2.bf16.msra.mxu0 0
        %508 = vmatprep.subr.bf16.mxu0 0
        %509 = vmatpush2.bf16.msra.mxu0 0
        %510 = vmatprep.subr.bf16.mxu0 0
        %511 = vmatpush2.bf16.msra.mxu0 0
        %512 = vmatprep.subr.bf16.mxu0 0
        %513 = vmatpush2.bf16.msra.mxu0 0
        %514 = vmatprep.mubr.bf16.mxu0 0
        %515 = vmatmul.mubr.bf16.gmra.mxu0 %v480
        %v516 = vpop.f32.mrf.mxu0
        %v517 = vadd.f32 0.0, %v516
        %v518 = vpop.f32.mrf.mxu0
        %v519 = vpop.f32.mrf.mxu0
        %v520 = vpop.f32.mrf.mxu0
        %521 = vdwg.mxu0
        %v522 = vadd.f32 %v474, %v517
        %v523 = vxor.u32 %v522, 2147483648
        %v524 = vmul.f32 %v523, 1.442695
        %v525 = vpow.pop %v524
        %v526 = vadd.f32 %v525, 1.0
        %v527 = vrcp.pop %v526
        %v528 = vmul.f32 1.0, %v527
        %v529 = vtanh.pop %v522
        %v530 = vmul.f32 %v528, %v461
        %532 = vrot.lane.b32.xlu0 %v529, 64
        %v533 = vpop.permute.xlu0 %532
        %v535 = vmul.f32 %v528, %v533
        %537 = vrot.lane.b32.xlu0 %v535, 32
        %v538 = vpop.permute.xlu0 %537
        %v540 = vadd.f32 %v530, %v538
        %v541 = vtanh.pop %v540
        %543 = vrot.lane.b32.xlu0 %v541, 64
        %v544 = vpop.permute.xlu0 %543
        %v546 = vmul.f32 %v528, %v544
        %548 = vrot.lane.b32.xlu0 %v546, 32
        %v549 = vpop.permute.xlu0 %548
        %s551 = scalar_lea.vmem [#allocation3], 8
        %552 = vst.msk [vmem:[%s551] sm:$0xff] %vm395, %v549
        %s553 = scalar_lea.vmem [#allocation2], 16
        %v554 = vld [vmem:[%s553] sm:$0xff]
        %v555 = vpack.c.bf16 %v546, %v546
        %557 = vrot.lane.b32.xlu0 %v555, 32
        %v558 = vpop.permute.xlu0 %557
        %v560 = vsel %vm395, %v558, 0
        %562 = vmatprep.subr.bf16.mxu0 0
        %563 = vmatpush1.bf16.msra.mxu0 0
        %564 = vmatprep.subr.bf16.mxu0 0
        %565 = vmatpush1.bf16.msra.mxu0 0
        %566 = vmatprep.subr.bf16.mxu0 0
        %567 = vmatpush1.bf16.msra.mxu0 0
        %568 = vmatprep.subr.bf16.mxu0 0
        %569 = vmatpush1.bf16.msra.mxu0 0
        %570 = vmatprep.subr.bf16.mxu0 0
        %571 = vmatpush1.bf16.msra.mxu0 0
        %572 = vmatprep.subr.bf16.mxu0 0
        %573 = vmatpush1.bf16.msra.mxu0 0
        %574 = vmatprep.subr.bf16.mxu0 0
        %575 = vmatpush1.bf16.msra.mxu0 %v392
        %576 = vmatprep.subr.bf16.mxu0 0
        %577 = vmatpush1.bf16.msra.mxu0 %v391
        %578 = vmatprep.subr.bf16.mxu0 0
        %579 = vmatpush2.bf16.msra.mxu0 0
        %580 = vmatprep.subr.bf16.mxu0 0
        %581 = vmatpush2.bf16.msra.mxu0 0
        %582 = vmatprep.subr.bf16.mxu0 0
        %583 = vmatpush2.bf16.msra.mxu0 0
        %584 = vmatprep.subr.bf16.mxu0 0
        %585 = vmatpush2.bf16.msra.mxu0 0
        %586 = vmatprep.subr.bf16.mxu0 0
        %587 = vmatpush2.bf16.msra.mxu0 0
        %588 = vmatprep.subr.bf16.mxu0 0
        %589 = vmatpush2.bf16.msra.mxu0 0
        %590 = vmatprep.subr.bf16.mxu0 0
        %591 = vmatpush2.bf16.msra.mxu0 0
        %592 = vmatprep.subr.bf16.mxu0 0
        %593 = vmatpush2.bf16.msra.mxu0 0
        %594 = vmatprep.mubr.bf16.mxu0 0
        %595 = vmatmul.mubr.bf16.gmra.mxu0 %v560
        %v596 = vpop.f32.mrf.mxu0
        %v597 = vadd.f32 0.0, %v596
        %v598 = vpop.f32.mrf.mxu0
        %v599 = vpop.f32.mrf.mxu0
        %v600 = vpop.f32.mrf.mxu0
        %601 = vdwg.mxu0
        %v602 = vadd.f32 %v554, %v597
        %v603 = vxor.u32 %v602, 2147483648
        %v604 = vmul.f32 %v603, 1.442695
        %v605 = vpow.pop %v604
        %v606 = vadd.f32 %v605, 1.0
        %v607 = vrcp.pop %v606
        %v608 = vmul.f32 1.0, %v607
        %v609 = vtanh.pop %v602
        %v610 = vmul.f32 %v608, %v540
        %612 = vrot.lane.b32.xlu0 %v609, 64
        %v613 = vpop.permute.xlu0 %612
        %v615 = vmul.f32 %v608, %v613
        %617 = vrot.lane.b32.xlu0 %v615, 32
        %v618 = vpop.permute.xlu0 %617
        %v620 = vadd.f32 %v610, %v618
        %v621 = vtanh.pop %v620
        %623 = vrot.lane.b32.xlu0 %v621, 64
        %v624 = vpop.permute.xlu0 %623
        %v626 = vmul.f32 %v608, %v624
        %628 = vrot.lane.b32.xlu0 %v626, 32
        %v629 = vpop.permute.xlu0 %628
        %s631 = scalar_lea.vmem [#allocation3], 16
        %632 = vst.msk [vmem:[%s631] sm:$0xff] %vm395, %v629
        %s633 = scalar_lea.vmem [#allocation2], 24
        %v634 = vld [vmem:[%s633] sm:$0xff]
        %v635 = vpack.c.bf16 %v626, %v626
        %637 = vrot.lane.b32.xlu0 %v635, 32
        %v638 = vpop.permute.xlu0 %637
        %v640 = vsel %vm395, %v638, 0
        %642 = vmatprep.subr.bf16.mxu0 0
        %643 = vmatpush1.bf16.msra.mxu0 0
        %644 = vmatprep.subr.bf16.mxu0 0
        %645 = vmatpush1.bf16.msra.mxu0 0
        %646 = vmatprep.subr.bf16.mxu0 0
        %647 = vmatpush1.bf16.msra.mxu0 0
        %648 = vmatprep.subr.bf16.mxu0 0
        %649 = vmatpush1.bf16.msra.mxu0 0
        %650 = vmatprep.subr.bf16.mxu0 0
        %651 = vmatpush1.bf16.msra.mxu0 0
        %652 = vmatprep.subr.bf16.mxu0 0
        %653 = vmatpush1.bf16.msra.mxu0 0
        %654 = vmatprep.subr.bf16.mxu0 0
        %655 = vmatpush1.bf16.msra.mxu0 %v392
        %656 = vmatprep.subr.bf16.mxu0 0
        %657 = vmatpush1.bf16.msra.mxu0 %v391
        %658 = vmatprep.subr.bf16.mxu0 0
        %659 = vmatpush2.bf16.msra.mxu0 0
        %660 = vmatprep.subr.bf16.mxu0 0
        %661 = vmatpush2.bf16.msra.mxu0 0
        %662 = vmatprep.subr.bf16.mxu0 0
        %663 = vmatpush2.bf16.msra.mxu0 0
        %664 = vmatprep.subr.bf16.mxu0 0
        %665 = vmatpush2.bf16.msra.mxu0 0
        %666 = vmatprep.subr.bf16.mxu0 0
        %667 = vmatpush2.bf16.msra.mxu0 0
        %668 = vmatprep.subr.bf16.mxu0 0
        %669 = vmatpush2.bf16.msra.mxu0 0
        %670 = vmatprep.subr.bf16.mxu0 0
        %671 = vmatpush2.bf16.msra.mxu0 0
        %672 = vmatprep.subr.bf16.mxu0 0
        %673 = vmatpush2.bf16.msra.mxu0 0
        %674 = vmatprep.mubr.bf16.mxu0 0
        %675 = vmatmul.mubr.bf16.gmra.mxu0 %v640
        %v676 = vpop.f32.mrf.mxu0
        %v677 = vadd.f32 0.0, %v676
        %v678 = vpop.f32.mrf.mxu0
        %v679 = vpop.f32.mrf.mxu0
        %v680 = vpop.f32.mrf.mxu0
        %681 = vdwg.mxu0
        %v682 = vadd.f32 %v634, %v677
        %v683 = vxor.u32 %v682, 2147483648
        %v684 = vmul.f32 %v683, 1.442695
        %v685 = vpow.pop %v684
        %v686 = vadd.f32 %v685, 1.0
        %v687 = vrcp.pop %v686
        %v688 = vmul.f32 1.0, %v687
        %v689 = vtanh.pop %v682
        %v690 = vmul.f32 %v688, %v620
        %692 = vrot.lane.b32.xlu0 %v689, 64
        %v693 = vpop.permute.xlu0 %692
        %v695 = vmul.f32 %v688, %v693
        %697 = vrot.lane.b32.xlu0 %v695, 32
        %v698 = vpop.permute.xlu0 %697
        %v700 = vadd.f32 %v690, %v698
        %v701 = vtanh.pop %v700
        %703 = vrot.lane.b32.xlu0 %v701, 64
        %v704 = vpop.permute.xlu0 %703
        %v706 = vmul.f32 %v688, %v704
        %708 = vrot.lane.b32.xlu0 %v706, 32
        %v709 = vpop.permute.xlu0 %708
        %s711 = scalar_lea.vmem [#allocation3], 24
        %712 = vst.msk [vmem:[%s711] sm:$0xff] %vm395, %v709
        %713 = vst.msk [vmem:[#allocation4] sm:$0xff] %vm395, %v709
        %715 = vrot.lane.b32.xlu0 %v700, 96
        %v716 = vpop.permute.xlu0 %715
        %718 = vst.msk [vmem:[#allocation5] sm:$0xff] %vm395, %v716
        %v719 = vld [vmem:[#allocation3] sm:$0xff]
        %v720 = vld [vmem:[#allocation3 + $0x8] sm:$0xff]
        %v721 = vld [vmem:[#allocation3 + $0x10] sm:$0xff]
        %v722 = vld [vmem:[#allocation3 + $0x18] sm:$0xff]
        %v723 = vpack.c.bf16 %v720, %v719
        %v724 = vpack.c.bf16 %v722, %v721
        %v725 = vld [vmem:[%s3] sm:$0xf]
        %v726 = vld [vmem:[%s3 + $0x4] sm:$0xf]
        %v727 = vld [vmem:[%s3 + $0x8] sm:$0xf]
        %v728 = vld [vmem:[%s3 + $0xc] sm:$0xf]
        %v729 = vld [vmem:[%s5] sm:$0x1]
        %v731 = vlaneseq
        %v732 = vshrl.u32 %v731, 7
        %v733 = vsub.s32 0, %v732
        %v734 = vrot.slane %v729, %v733
        %v740 = vunpack.c.l.b16 %v725
        %v741 = vunpack.c.l.b16 %v726
        %v742 = vunpack.c.l.b16 %v727
        %v743 = vunpack.c.l.b16 %v728
        %v744 = vpack.c.b16 %v741, %v740
        %v745 = vpack.c.b16 %v743, %v742
        %v749 = vsel %vm395, %v723, 0
        %v752 = vsel %vm395, %v724, 0
        %754 = vmatprep.subr.bf16.mxu0 0
        %755 = vmatpush1.bf16.msra.mxu0 0
        %756 = vmatprep.subr.bf16.mxu0 0
        %757 = vmatpush1.bf16.msra.mxu0 0
        %758 = vmatprep.subr.bf16.mxu0 0
        %759 = vmatpush1.bf16.msra.mxu0 0
        %760 = vmatprep.subr.bf16.mxu0 0
        %761 = vmatpush1.bf16.msra.mxu0 0
        %762 = vmatprep.subr.bf16.mxu0 0
        %763 = vmatpush1.bf16.msra.mxu0 0
        %764 = vmatprep.subr.bf16.mxu0 0
        %765 = vmatpush1.bf16.msra.mxu0 0
        %766 = vmatprep.subr.bf16.mxu0 0
        %767 = vmatpush1.bf16.msra.mxu0 %v745
        %768 = vmatprep.subr.bf16.mxu0 0
        %769 = vmatpush1.bf16.msra.mxu0 %v744
        %770 = vmatprep.subr.bf16.mxu0 0
        %771 = vmatpush2.bf16.msra.mxu0 0
        %772 = vmatprep.subr.bf16.mxu0 0
        %773 = vmatpush2.bf16.msra.mxu0 0
        %774 = vmatprep.subr.bf16.mxu0 0
        %775 = vmatpush2.bf16.msra.mxu0 0
        %776 = vmatprep.subr.bf16.mxu0 0
        %777 = vmatpush2.bf16.msra.mxu0 0
        %778 = vmatprep.subr.bf16.mxu0 0
        %779 = vmatpush2.bf16.msra.mxu0 0
        %780 = vmatprep.subr.bf16.mxu0 0
        %781 = vmatpush2.bf16.msra.mxu0 0
        %782 = vmatprep.subr.bf16.mxu0 0
        %783 = vmatpush2.bf16.msra.mxu0 0
        %784 = vmatprep.subr.bf16.mxu0 0
        %785 = vmatpush2.bf16.msra.mxu0 0
        %786 = vmatprep.mubr.bf16.mxu0 0
        %787 = vmatmul.mubr.bf16.gmra.mxu0 %v749
        %v788 = vpop.f32.mrf.mxu0
        %v789 = vadd.f32 %v734, %v788
        %v790 = vpop.f32.mrf.mxu0
        %v791 = vpop.f32.mrf.mxu0
        %v792 = vadd.f32 %v734, %v791
        %v793 = vpop.f32.mrf.mxu0
        %794 = vmatprep.mubr.bf16.mxu0 0
        %795 = vmatmul.mubr.bf16.gmra.mxu0 %v752
        %v796 = vpop.f32.mrf.mxu0
        %v797 = vadd.f32 %v734, %v796
        %v798 = vpop.f32.mrf.mxu0
        %v799 = vpop.f32.mrf.mxu0
        %v800 = vadd.f32 %v734, %v799
        %v801 = vpop.f32.mrf.mxu0
        %802 = vdwg.mxu0
        %803 = vst.msk [vmem:[%s286] sm:$0xff] %vm315, %v789
        %804 = vst.msk [vmem:[%s286 + $0x8] sm:$0xff] %vm315, %v792
        %805 = vst.msk [vmem:[%s286 + $0x10] sm:$0xff] %vm315, %v797
        %806 = vst.msk [vmem:[%s286 + $0x18] sm:$0xff] %vm315, %v800
        %s807 = sand.u32 %s178, 1
        %s808 = scalar_lea.sflag [#allocation8], %s807
        %s809 = sand.u32 %s178, 1
        %s810 = smul.addr %s809, 32
        %s811 = scalar_lea.vmem [#allocation9], %s810
        // Predicated region
        $region53: #{tpu_custom_call.1} parent=43 // pred_check
          %p812 = pneg %p188
        $region54: #{tpu_custom_call.1} parent=43 // pred_check_branch
          %814 = sbr.rel (%p812) target = $region56
        $region55: #{tpu_custom_call.1} parent=43 // pred_region
          %s815 = smul.u32 4, %s28
          %s817 = ssub.s32 512, 512
          %818 = vsyncadd %s808, %s817
          %s819 = sadd.s32 %s27, %s815
          %s820 = smul.addr %s819, 128
          %s821 = scalar_lea.hbm %s6, %s820
          %s822 = sshll.u32 %s811, 4
          %s823 = int_to_ptr.vmem [resolvable:$true] %s822
          %828 = dma.vmem_to_hbm [thread:$0]  %s823, 512, %s821, %s808, 128, 128, 8
        $region56: #{tpu_custom_call.1} parent=43 // pred_fallthru
          _
      $region44: #{tpu_custom_call.1} parent=5 // pred_fallthru
        _
      %p829 = scmp.le.s32.totalorder 2, %s18
      // Predicated region
      $region57: #{tpu_custom_call.1} parent=5 // pred_check
        %p830 = pneg %p829
      $region58: #{tpu_custom_call.1} parent=5 // pred_check_branch
        %832 = sbr.rel (%p830) target = $region60
      $region59: #{tpu_custom_call.1} parent=5 // pred_region
        %s833 = ssub.s32 %s18, 2
        // Predicated region
        $region61: #{tpu_custom_call.1} parent=59 // pred_check
          %p834 = pneg %p194
        $region62: #{tpu_custom_call.1} parent=59 // pred_check_branch
          %836 = sbr.rel (%p834) target = $region64
        $region63: #{tpu_custom_call.1} parent=59 // pred_region
          %s837 = sand.u32 %s179, 1
          %s838 = scalar_lea.sflag [#allocation8], %s837
          %s839 = sand.u32 %s179, 1
          %s840 = smul.addr %s839, 32
          %s841 = scalar_lea.vmem [#allocation9], %s840
          %842 = dma.done %s838, 512
        $region64: #{tpu_custom_call.1} parent=59 // pred_fallthru
          _
      $region60: #{tpu_custom_call.1} parent=5 // pred_fallthru
        _
    $region6: #{tpu_custom_call.1} parent=1 // loop_footer
      %s22 = sadd.s32 1, %s18
    $region7: #{tpu_custom_call.1} parent=1 // loop_footer_branch
      %17 = sbr.rel target = $region3
    $region8: #{tpu_custom_call.1} parent=1 // loop_exit
      _
    %843 = vsyncpa [#allocation7], 1
    %s844 = scalar_lea.sflag [#allocation7], 1
    %845 = vsyncpa %s844, 1
    %846 = vsyncpa [#allocation8], 1
    %s847 = scalar_lea.sflag [#allocation8], 1
    %848 = vsyncpa %s847, 1

</llo_original>
